<compile_context>
chip_gen: v7x
topology: tpu7x:2x2x1
jax: 0.10.0
libtpu: 0.0.40
codegen_flags: <defaults>
</compile_context>

<pallas_src>
import functools

import jax
import jax.numpy as jnp
from jax.experimental import pallas as pl
from jax.experimental.pallas import tpu as pltpu

IN_DIM = 4
HIDDEN = 128
NUM_ACTIONS = 2
LANE = 128
P_ROWS = 8  # packed parameter tile: (8, 128) f32 == one vreg


def pack_params(w1, b1, w2, b2):
    """Pack nn.Linear-layout params (w1:(128,4), b1:(128,), w2:(2,128),
    b2:(2,)) into a single (8, 128) f32 tile.  Call ONCE at init."""
    p = jnp.zeros((P_ROWS, LANE), jnp.float32)
    p = p.at[0:IN_DIM, :].set(w1.T.astype(jnp.float32))                   # W1^T
    p = p.at[IN_DIM, :].set(b1.astype(jnp.float32))                       # b1
    p = p.at[IN_DIM + 1, :NUM_ACTIONS].set(b2.astype(jnp.float32))        # b2
    p = p.at[IN_DIM + 2:IN_DIM + 2 + NUM_ACTIONS, :].set(
        w2.astype(jnp.float32))                                           # W2
    return p


def policy_kernel(x_ref, p_ref, o_ref):
    # x_ref: (TB, 4)    batch tile of CartPole states
    # p_ref: (8, 128)   packed parameters (resident: constant index_map)
    # o_ref: (TB, 2)    per-state action probabilities
    x = x_ref[...]                                   # (TB, 4)
    p = p_ref[...]                                   # (8, 128) -> one vreg

    # --- fc1 + ReLU: 4 broadcast FMAs on the VPU (no MXU push for K=4) ---
    h = p[IN_DIM:IN_DIM + 1, :]                      # b1, (1, 128)
    h = h + x[:, 0:1] * p[0:1, :]
    h = h + x[:, 1:2] * p[1:2, :]
    h = h + x[:, 2:3] * p[2:3, :]
    h = h + x[:, 3:4] * p[3:4, :]
    h = jnp.maximum(h, 0.0)                          # (TB, 128)

    # --- fc2: two lane reductions against the two W2 rows (+ b2) ---
    b2_row = p[IN_DIM + 1:IN_DIM + 2, :]             # (1, 128), lanes 0:2 real
    w2_r0 = p[IN_DIM + 2:IN_DIM + 3, :]              # (1, 128)
    w2_r1 = p[IN_DIM + 3:IN_DIM + 4, :]              # (1, 128)
    l0 = jnp.sum(h * w2_r0, axis=-1, keepdims=True) + b2_row[:, 0:1]  # (TB, 1)
    l1 = jnp.sum(h * w2_r1, axis=-1, keepdims=True) + b2_row[:, 1:2]  # (TB, 1)

    # --- softmax over the 2 action logits, closed form (stable sigmoid) ---
    p1 = 1.0 / (1.0 + jnp.exp(l0 - l1))              # (TB, 1)
    p0 = 1.0 - p1

    col = jax.lax.broadcasted_iota(jnp.int32, (x.shape[0], NUM_ACTIONS), 1)
    o_ref[...] = jnp.where(col == 0, p0, p1)         # (TB, 2)


def _round_up(n, m):
    return ((n + m - 1) // m) * m


@functools.partial(jax.jit, static_argnames=("block_b",))
def policy_forward(x, packed_params, *, block_b=128):
    """x: (4,) single state (original torch usage) or (B, 4) batch.
    packed_params: output of pack_params (hoisted, built once).
    Returns action probabilities of shape (2,) or (B, 2)."""
    single = x.ndim == 1
    xb = x[None, :] if single else x
    xb = xb.astype(jnp.float32)
    b = xb.shape[0]

    tb = min(block_b, _round_up(b, 8))       # batch tile, multiple of 8 sublanes
    b_pad = _round_up(b, tb)
    if b_pad != b:
        xb = jnp.zeros((b_pad, IN_DIM), jnp.float32).at[:b].set(xb)

    out = pl.pallas_call(
        policy_kernel,
        out_shape=jax.ShapeDtypeStruct((b_pad, NUM_ACTIONS), jnp.float32),
        grid=(b_pad // tb,),
        in_specs=[
            pl.BlockSpec((tb, IN_DIM), lambda i: (i, 0)),
            # constant index -> params DMA'd once, stay resident in VMEM
            pl.BlockSpec((P_ROWS, LANE), lambda i: (0, 0)),
        ],
        out_specs=pl.BlockSpec((tb, NUM_ACTIONS), lambda i: (i, 0)),
        compiler_params=pltpu.CompilerParams(
            dimension_semantics=("parallel",)),  # shard batch across TCs (v7x)
    )(xb, packed_params)

    out = out[:b]
    return out[0] if single else out


def policy_forward_ref(x, w1, b1, w2, b2):
    h = jnp.maximum(x @ w1.T + b1, 0.0)
    logits = h @ w2.T + b2
    return jax.nn.softmax(logits, axis=-1)


# TODO(synk): put_data / train_net (Adam, REINFORCE loss, backward) are
# host-side training logic outside the forward pass and are not kernelized.

if __name__ == "__main__":
    key = jax.random.PRNGKey(0)
    k_x, k_w1, k_b1, k_w2, k_b2 = jax.random.split(key, 5)

    # nn.Linear default-style init: U[-1/sqrt(fan_in), +1/sqrt(fan_in)]
    bound1 = 1.0 / jnp.sqrt(jnp.float32(IN_DIM))
    bound2 = 1.0 / jnp.sqrt(jnp.float32(HIDDEN))
    w1 = jax.random.uniform(k_w1, (HIDDEN, IN_DIM), jnp.float32, -bound1, bound1)
    b1 = jax.random.uniform(k_b1, (HIDDEN,), jnp.float32, -bound1, bound1)
    w2 = jax.random.uniform(k_w2, (NUM_ACTIONS, HIDDEN), jnp.float32, -bound2, bound2)
    b2 = jax.random.uniform(k_b2, (NUM_ACTIONS,), jnp.float32, -bound2, bound2)

    # Parameter packing hoisted out of the forward: done exactly once.
    packed = pack_params(w1, b1, w2, b2)

    # Batched rollout states (small batch for the demo).
    B = 32
    xb = jax.random.normal(k_x, (B, IN_DIM), jnp.float32)

    probs_b = jax.block_until_ready(policy_forward(xb, packed))
    ref_b = jax.block_until_ready(policy_forward_ref(xb, w1, b1, w2, b2))

    assert probs_b.shape == (B, NUM_ACTIONS)
    assert jnp.allclose(jnp.sum(probs_b, axis=-1), 1.0, atol=1e-5)
    assert jnp.allclose(probs_b, ref_b, atol=1e-5, rtol=1e-5)

    # Single-state path (matches original torch usage: x of shape (4,),
    # softmax over the 2 logits == dim=0 on the 1-D output).
    x1 = xb[0]
    probs_1 = jax.block_until_ready(policy_forward(x1, packed))
    assert probs_1.shape == (NUM_ACTIONS,)
    assert jnp.allclose(probs_1, ref_b[0], atol=1e-5, rtol=1e-5)

    print("KERNEL_OK")
</pallas_src>

<mosaic_0001>
module attributes {stable_mosaic.version = 11 : i64} {
  func.func @policy_kernel(%arg0: i32, %arg1: memref<32x4xf32, #tpu.memory_space<vmem>>, %arg2: memref<8x128xf32, #tpu.memory_space<vmem>>, %arg3: memref<32x2xf32, #tpu.memory_space<vmem>>) attributes {dimension_semantics = [#tpu.dimension_semantics<parallel>], iteration_bounds = array<i64: 1>, scalar_prefetch = 0 : i64, scratch_operands = 0 : i64, tpu.core_type = #tpu.core_type<tc>, window_params = [{transform_indices = @transform_0, window_bounds = array<i64: 32, 4>}, {pipeline_mode = #tpu.pipeline_mode<synchronous>, transform_indices = @transform_1, window_bounds = array<i64: 8, 128>}, {transform_indices = @transform_2, window_bounds = array<i64: 32, 2>}]} {
    %c0 = arith.constant 0 : index
    %c0_0 = arith.constant 0 : index
    %0 = vector.load %arg1[%c0, %c0_0] : memref<32x4xf32, #tpu.memory_space<vmem>>, vector<32x4xf32>
    %c0_1 = arith.constant 0 : index
    %c0_2 = arith.constant 0 : index
    %1 = vector.load %arg2[%c0_1, %c0_2] : memref<8x128xf32, #tpu.memory_space<vmem>>, vector<8x128xf32>
    %2 = vector.extract_strided_slice %1 {offsets = [4, 0], sizes = [1, 128], strides = [1, 1]} : vector<8x128xf32> to vector<1x128xf32>
    %3 = vector.extract_strided_slice %0 {offsets = [0, 0], sizes = [32, 1], strides = [1, 1]} : vector<32x4xf32> to vector<32x1xf32>
    %4 = vector.extract_strided_slice %1 {offsets = [0, 0], sizes = [1, 128], strides = [1, 1]} : vector<8x128xf32> to vector<1x128xf32>
    %5 = vector.broadcast %3 : vector<32x1xf32> to vector<32x128xf32>
    %6 = vector.broadcast %4 : vector<1x128xf32> to vector<32x128xf32>
    %7 = arith.mulf %5, %6 : vector<32x128xf32>
    %8 = vector.broadcast %2 : vector<1x128xf32> to vector<32x128xf32>
    %9 = arith.addf %8, %7 : vector<32x128xf32>
    %10 = vector.extract_strided_slice %0 {offsets = [0, 1], sizes = [32, 1], strides = [1, 1]} : vector<32x4xf32> to vector<32x1xf32>
    %11 = vector.extract_strided_slice %1 {offsets = [1, 0], sizes = [1, 128], strides = [1, 1]} : vector<8x128xf32> to vector<1x128xf32>
    %12 = vector.broadcast %10 : vector<32x1xf32> to vector<32x128xf32>
    %13 = vector.broadcast %11 : vector<1x128xf32> to vector<32x128xf32>
    %14 = arith.mulf %12, %13 : vector<32x128xf32>
    %15 = arith.addf %9, %14 : vector<32x128xf32>
    %16 = vector.extract_strided_slice %0 {offsets = [0, 2], sizes = [32, 1], strides = [1, 1]} : vector<32x4xf32> to vector<32x1xf32>
    %17 = vector.extract_strided_slice %1 {offsets = [2, 0], sizes = [1, 128], strides = [1, 1]} : vector<8x128xf32> to vector<1x128xf32>
    %18 = vector.broadcast %16 : vector<32x1xf32> to vector<32x128xf32>
    %19 = vector.broadcast %17 : vector<1x128xf32> to vector<32x128xf32>
    %20 = arith.mulf %18, %19 : vector<32x128xf32>
    %21 = arith.addf %15, %20 : vector<32x128xf32>
    %22 = vector.extract_strided_slice %0 {offsets = [0, 3], sizes = [32, 1], strides = [1, 1]} : vector<32x4xf32> to vector<32x1xf32>
    %23 = vector.extract_strided_slice %1 {offsets = [3, 0], sizes = [1, 128], strides = [1, 1]} : vector<8x128xf32> to vector<1x128xf32>
    %24 = vector.broadcast %22 : vector<32x1xf32> to vector<32x128xf32>
    %25 = vector.broadcast %23 : vector<1x128xf32> to vector<32x128xf32>
    %26 = arith.mulf %24, %25 : vector<32x128xf32>
    %27 = arith.addf %21, %26 : vector<32x128xf32>
    %cst = arith.constant 0.000000e+00 : f32
    %28 = vector.broadcast %cst : f32 to vector<32x128xf32>
    %29 = arith.maximumf %27, %28 : vector<32x128xf32>
    %30 = vector.extract_strided_slice %1 {offsets = [5, 0], sizes = [1, 128], strides = [1, 1]} : vector<8x128xf32> to vector<1x128xf32>
    %31 = vector.extract_strided_slice %1 {offsets = [6, 0], sizes = [1, 128], strides = [1, 1]} : vector<8x128xf32> to vector<1x128xf32>
    %32 = vector.extract_strided_slice %1 {offsets = [7, 0], sizes = [1, 128], strides = [1, 1]} : vector<8x128xf32> to vector<1x128xf32>
    %33 = vector.broadcast %31 : vector<1x128xf32> to vector<32x128xf32>
    %34 = arith.mulf %29, %33 : vector<32x128xf32>
    %cst_3 = arith.constant dense<0.000000e+00> : vector<32xf32>
    %35 = vector.multi_reduction <add>, %34, %cst_3 [1] : vector<32x128xf32> to vector<32xf32>
    %36 = vector.shape_cast %35 : vector<32xf32> to vector<32x1xf32>
    %37 = vector.extract_strided_slice %30 {offsets = [0, 0], sizes = [1, 1], strides = [1, 1]} : vector<1x128xf32> to vector<1x1xf32>
    %38 = vector.broadcast %37 : vector<1x1xf32> to vector<32x1xf32>
    %39 = arith.addf %36, %38 : vector<32x1xf32>
    %40 = vector.broadcast %32 : vector<1x128xf32> to vector<32x128xf32>
    %41 = arith.mulf %29, %40 : vector<32x128xf32>
    %cst_4 = arith.constant dense<0.000000e+00> : vector<32xf32>
    %42 = vector.multi_reduction <add>, %41, %cst_4 [1] : vector<32x128xf32> to vector<32xf32>
    %43 = vector.shape_cast %42 : vector<32xf32> to vector<32x1xf32>
    %44 = vector.extract_strided_slice %30 {offsets = [0, 1], sizes = [1, 1], strides = [1, 1]} : vector<1x128xf32> to vector<1x1xf32>
    %45 = vector.broadcast %44 : vector<1x1xf32> to vector<32x1xf32>
    %46 = arith.addf %43, %45 : vector<32x1xf32>
    %47 = arith.subf %39, %46 : vector<32x1xf32>
    %48 = math.exp %47 : vector<32x1xf32>
    %cst_5 = arith.constant 1.000000e+00 : f32
    %49 = vector.broadcast %cst_5 : f32 to vector<32x1xf32>
    %50 = arith.addf %49, %48 : vector<32x1xf32>
    %cst_6 = arith.constant 1.000000e+00 : f32
    %51 = vector.broadcast %cst_6 : f32 to vector<32x1xf32>
    %52 = arith.divf %51, %50 : vector<32x1xf32>
    %cst_7 = arith.constant 1.000000e+00 : f32
    %53 = vector.broadcast %cst_7 : f32 to vector<32x1xf32>
    %54 = arith.subf %53, %52 : vector<32x1xf32>
    %55 = tpu.iota {dimensions = array<i32: 1>} : vector<32x2xi32>
    %c0_i32 = arith.constant 0 : i32
    %56 = vector.broadcast %c0_i32 : i32 to vector<32x2xi32>
    %57 = arith.cmpi eq, %55, %56 : vector<32x2xi32>
    %58 = vector.shape_cast %54 : vector<32x1xf32> to vector<32x1xf32>
    %59 = vector.broadcast %58 : vector<32x1xf32> to vector<32x2xf32>
    %60 = vector.shape_cast %52 : vector<32x1xf32> to vector<32x1xf32>
    %61 = vector.broadcast %60 : vector<32x1xf32> to vector<32x2xf32>
    %62 = arith.select %57, %59, %61 : vector<32x2xi1>, vector<32x2xf32>
    %c0_8 = arith.constant 0 : index
    %c0_9 = arith.constant 0 : index
    %63 = vector.load %arg3[%c0_8, %c0_9] : memref<32x2xf32, #tpu.memory_space<vmem>>, vector<32x2xf32>
    tpu.vector_store %arg3[%c0_8, %c0_9], %62 {strides = array<i32>} : memref<32x2xf32, #tpu.memory_space<vmem>>, vector<32x2xf32>,
    return
  }
  func.func @transform_0(%arg0: i32) -> (i32, i32) {
    %c0_i32 = arith.constant 0 : i32
    %c0_i32_0 = arith.constant 0 : i32
    return %arg0, %c0_i32 : i32, i32
  }
  func.func @transform_1(%arg0: i32) -> (i32, i32) {
    %c0_i32 = arith.constant 0 : i32
    %c0_i32_0 = arith.constant 0 : i32
    %c0_i32_1 = arith.constant 0 : i32
    return %c0_i32, %c0_i32_0 : i32, i32
  }
  func.func @transform_2(%arg0: i32) -> (i32, i32) {
    %c0_i32 = arith.constant 0 : i32
    %c0_i32_0 = arith.constant 0 : i32
    return %arg0, %c0_i32 : i32, i32
  }
}

</mosaic_0001>

<llo_original>
// kernel: policy_forward.1
$region0: #{policy_forward.1}
  #allocation0 [shape = 'u32[]', space=smem, size = 0x4, offset = 0x4, fixed_abs, tag = 'smem constant byte address 0x4 - core index']
  #allocation1 [shape = 'u32[144,128]{1,0:T(1,128)}', space=vmem, size = 0x12000, scoped, tag = 'internal scratch']
  %s0 = inlined_call_operand.vmem [shape: f32[32,4], index: 0, kind: input, shape index: {}]
  %s1 = inlined_call_operand.vmem [shape: f32[8,128], index: 1, kind: input, shape index: {}]
  %s2 = inlined_call_operand.vmem [shape: f32[32,2], index: 2, kind: output, shape index: {}]
  %s3 = sld [smem:[#allocation0]]
  $region18: #{policy_forward.1} parent=0
    _
  %s5 = ssub.s32 1, %s3
  %s6 = scalar_select 0, %s5, %s3
  // Predicated region
  $region2: #{policy_forward.1} parent=0 // pred_check
    _
  $region3: #{policy_forward.1} parent=0 // pred_check_branch
    %8 = sbr.rel (0) target = $region5
  $region4: #{policy_forward.1} parent=0 // pred_region
    _
  $region5: #{policy_forward.1} parent=0 // pred_fallthru
    _
  // Predicated region
  $region6: #{policy_forward.1} parent=0 // pred_check
    _
  $region7: #{policy_forward.1} parent=0 // pred_check_branch
    %10 = sbr.rel (0) target = $region9
  $region8: #{policy_forward.1} parent=0 // pred_region
    _
  $region9: #{policy_forward.1} parent=0 // pred_fallthru
    _
  %v11 = vld [vmem:[%s0] sm:$0xff]
  %v12 = vld [vmem:[%s0 + $0x8] sm:$0xff]
  %v13 = vld [vmem:[%s0 + $0x10] sm:$0xff]
  %v14 = vld [vmem:[%s0 + $0x18] sm:$0xff]
  %v15 = vld [vmem:[%s1] sm:$0xff]
  %17 = vset.pattern.permute.xlu0 0
  %18 = vperm.xlu0 %17, %v11
  %v19 = vpop.permute.xlu0 %18
  %22 = vset.pattern.permute.xlu0 0
  %23 = vperm.xlu0 %22, %v12
  %v24 = vpop.permute.xlu0 %23
  %27 = vset.pattern.permute.xlu0 0
  %28 = vperm.xlu0 %27, %v13
  %v29 = vpop.permute.xlu0 %28
  %32 = vset.pattern.permute.xlu0 0
  %33 = vperm.xlu0 %32, %v14
  %v34 = vpop.permute.xlu0 %33
  %v36 = vlaneseq
  %v37 = vshrl.u32 %v36, 7
  %v38 = vsub.s32 0, %v37
  %v39 = vrot.slane %v15, %v38
  %v40 = vmul.f32 %v19, %v39
  %v41 = vmul.f32 %v24, %v39
  %v42 = vmul.f32 %v29, %v39
  %v43 = vmul.f32 %v34, %v39
  %v44 = vlaneseq
  %v45 = vshrl.u32 %v44, 7
  %v46 = vsub.s32 4, %v45
  %v47 = vrot.slane %v15, %v46
  %v48 = vadd.f32 %v47, %v40
  %v49 = vadd.f32 %v47, %v41
  %v50 = vadd.f32 %v47, %v42
  %v51 = vadd.f32 %v47, %v43
  %52 = vset.pattern.permute.xlu0 1
  %53 = vperm.xlu0 %52, %v11
  %v54 = vpop.permute.xlu0 %53
  %56 = vset.pattern.permute.xlu0 1
  %57 = vperm.xlu0 %56, %v12
  %v58 = vpop.permute.xlu0 %57
  %60 = vset.pattern.permute.xlu0 1
  %61 = vperm.xlu0 %60, %v13
  %v62 = vpop.permute.xlu0 %61
  %64 = vset.pattern.permute.xlu0 1
  %65 = vperm.xlu0 %64, %v14
  %v66 = vpop.permute.xlu0 %65
  %v68 = vlaneseq
  %v69 = vshrl.u32 %v68, 7
  %v70 = vsub.s32 1, %v69
  %v71 = vrot.slane %v15, %v70
  %v72 = vmul.f32 %v54, %v71
  %v73 = vmul.f32 %v58, %v71
  %v74 = vmul.f32 %v62, %v71
  %v75 = vmul.f32 %v66, %v71
  %v76 = vadd.f32 %v48, %v72
  %v77 = vadd.f32 %v49, %v73
  %v78 = vadd.f32 %v50, %v74
  %v79 = vadd.f32 %v51, %v75
  %80 = vset.pattern.permute.xlu0 2
  %81 = vperm.xlu0 %80, %v11
  %v82 = vpop.permute.xlu0 %81
  %84 = vset.pattern.permute.xlu0 2
  %85 = vperm.xlu0 %84, %v12
  %v86 = vpop.permute.xlu0 %85
  %88 = vset.pattern.permute.xlu0 2
  %89 = vperm.xlu0 %88, %v13
  %v90 = vpop.permute.xlu0 %89
  %92 = vset.pattern.permute.xlu0 2
  %93 = vperm.xlu0 %92, %v14
  %v94 = vpop.permute.xlu0 %93
  %v96 = vlaneseq
  %v97 = vshrl.u32 %v96, 7
  %v98 = vsub.s32 2, %v97
  %v99 = vrot.slane %v15, %v98
  %v100 = vmul.f32 %v82, %v99
  %v101 = vmul.f32 %v86, %v99
  %v102 = vmul.f32 %v90, %v99
  %v103 = vmul.f32 %v94, %v99
  %v104 = vadd.f32 %v76, %v100
  %v105 = vadd.f32 %v77, %v101
  %v106 = vadd.f32 %v78, %v102
  %v107 = vadd.f32 %v79, %v103
  %108 = vset.pattern.permute.xlu0 3
  %109 = vperm.xlu0 %108, %v11
  %v110 = vpop.permute.xlu0 %109
  %112 = vset.pattern.permute.xlu0 3
  %113 = vperm.xlu0 %112, %v12
  %v114 = vpop.permute.xlu0 %113
  %116 = vset.pattern.permute.xlu0 3
  %117 = vperm.xlu0 %116, %v13
  %v118 = vpop.permute.xlu0 %117
  %120 = vset.pattern.permute.xlu0 3
  %121 = vperm.xlu0 %120, %v14
  %v122 = vpop.permute.xlu0 %121
  %v124 = vlaneseq
  %v125 = vshrl.u32 %v124, 7
  %v126 = vsub.s32 3, %v125
  %v127 = vrot.slane %v15, %v126
  %v128 = vmul.f32 %v110, %v127
  %v129 = vmul.f32 %v114, %v127
  %v130 = vmul.f32 %v118, %v127
  %v131 = vmul.f32 %v122, %v127
  %v132 = vadd.f32 %v104, %v128
  %v133 = vadd.f32 %v105, %v129
  %v134 = vadd.f32 %v106, %v130
  %v135 = vadd.f32 %v107, %v131
  %v136 = vmax.f32 %v132, 0.0
  %v137 = vmax.f32 %v133, 0.0
  %v138 = vmax.f32 %v134, 0.0
  %v139 = vmax.f32 %v135, 0.0
  %v140 = vlaneseq
  %v141 = vshrl.u32 %v140, 7
  %v142 = vsub.s32 6, %v141
  %v143 = vrot.slane %v15, %v142
  %v144 = vmul.f32 %v136, %v143
  %v145 = vmul.f32 %v137, %v143
  %v146 = vmul.f32 %v138, %v143
  %v147 = vmul.f32 %v139, %v143
  %148 = vadd.xlane.f32.xlu0 %v144
  %v149 = vpop.xlane.xlu0 %148
  %150 = vadd.xlane.f32.xlu0 %v145
  %v151 = vpop.xlane.xlu0 %150
  %152 = vadd.xlane.f32.xlu0 %v146
  %v153 = vpop.xlane.xlu0 %152
  %154 = vadd.xlane.f32.xlu0 %v147
  %v155 = vpop.xlane.xlu0 %154
  %v156 = vlaneseq
  %v157 = vshrl.u32 %v156, 7
  %v158 = vsub.s32 5, %v157
  %v159 = vrot.slane %v15, %v158
  %v160 = vadd.f32 %v149, %v159
  %v161 = vadd.f32 %v151, %v159
  %v162 = vadd.f32 %v153, %v159
  %v163 = vadd.f32 %v155, %v159
  %v164 = vlaneseq
  %v165 = vshrl.u32 %v164, 7
  %v166 = vsub.s32 7, %v165
  %v167 = vrot.slane %v15, %v166
  %v168 = vmul.f32 %v136, %v167
  %v169 = vmul.f32 %v137, %v167
  %v170 = vmul.f32 %v138, %v167
  %v171 = vmul.f32 %v139, %v167
  %172 = vadd.xlane.f32.xlu0 %v168
  %v173 = vpop.xlane.xlu0 %172
  %174 = vadd.xlane.f32.xlu0 %v169
  %v175 = vpop.xlane.xlu0 %174
  %176 = vadd.xlane.f32.xlu0 %v170
  %v177 = vpop.xlane.xlu0 %176
  %178 = vadd.xlane.f32.xlu0 %v171
  %v179 = vpop.xlane.xlu0 %178
  %v180 = vadd.f32 %v173, %v159
  %v181 = vadd.f32 %v175, %v159
  %v182 = vadd.f32 %v177, %v159
  %v183 = vadd.f32 %v179, %v159
  %188 = vrot.lane.b32.xlu0 %v180, 127
  %v189 = vpop.permute.xlu0 %188
  %190 = vrot.lane.b32.xlu0 %v181, 127
  %v191 = vpop.permute.xlu0 %190
  %192 = vrot.lane.b32.xlu0 %v182, 127
  %v193 = vpop.permute.xlu0 %192
  %194 = vrot.lane.b32.xlu0 %v183, 127
  %v195 = vpop.permute.xlu0 %194
  %v200 = vsub.f32 %v160, %v189
  %v201 = vsub.f32 %v161, %v191
  %v202 = vsub.f32 %v162, %v193
  %v203 = vsub.f32 %v163, %v195
  %v204 = vmul.f32 %v200, 1.442695
  %v205 = vpow.pop %v204
  %v206 = vmul.f32 %v201, 1.442695
  %v207 = vpow.pop %v206
  %v208 = vmul.f32 %v202, 1.442695
  %v209 = vpow.pop %v208
  %v210 = vmul.f32 %v203, 1.442695
  %v211 = vpow.pop %v210
  %v212 = vadd.f32 %v205, 1.0
  %v213 = vadd.f32 %v207, 1.0
  %v214 = vadd.f32 %v209, 1.0
  %v215 = vadd.f32 %v211, 1.0
  %v216 = vrcp.pop %v212
  %v217 = vmul.f32 1.0, %v216
  %v218 = vrcp.pop %v213
  %v219 = vmul.f32 1.0, %v218
  %v220 = vrcp.pop %v214
  %v221 = vmul.f32 1.0, %v220
  %v222 = vrcp.pop %v215
  %v223 = vmul.f32 1.0, %v222
  %v224 = vsub.f32 1.0, %v217
  %v225 = vsub.f32 1.0, %v219
  %v226 = vsub.f32 1.0, %v221
  %v227 = vsub.f32 1.0, %v223
  %v228 = vlaneseq
  %v229 = vand.u32 %v228, 127
  %vm230 = vcmp.eq.s32.totalorder %v229, 0
  %232 = vset.pattern.permute.xlu0 0
  %233 = vperm.xlu0 %232, %v224
  %v234 = vpop.permute.xlu0 %233
  %237 = vset.pattern.permute.xlu0 0
  %238 = vperm.xlu0 %237, %v225
  %v239 = vpop.permute.xlu0 %238
  %242 = vset.pattern.permute.xlu0 0
  %243 = vperm.xlu0 %242, %v226
  %v244 = vpop.permute.xlu0 %243
  %247 = vset.pattern.permute.xlu0 0
  %248 = vperm.xlu0 %247, %v227
  %v249 = vpop.permute.xlu0 %248
  %252 = vset.pattern.permute.xlu0 0
  %253 = vperm.xlu0 %252, %v217
  %v254 = vpop.permute.xlu0 %253
  %257 = vset.pattern.permute.xlu0 0
  %258 = vperm.xlu0 %257, %v219
  %v259 = vpop.permute.xlu0 %258
  %262 = vset.pattern.permute.xlu0 0
  %263 = vperm.xlu0 %262, %v221
  %v264 = vpop.permute.xlu0 %263
  %267 = vset.pattern.permute.xlu0 0
  %268 = vperm.xlu0 %267, %v223
  %v269 = vpop.permute.xlu0 %268
  %v271 = vsel %vm230, %v234, %v254
  %v272 = vsel %vm230, %v239, %v259
  %v273 = vsel %vm230, %v244, %v264
  %v274 = vsel %vm230, %v249, %v269
  %vm275 = vcmask 15360
  %276 = vst.msk [vmem:[%s2] sm:$0xff] %vm275, %v271
  %277 = vst.msk [vmem:[%s2 + $0x8] sm:$0xff] %vm275, %v272
  %278 = vst.msk [vmem:[%s2 + $0x10] sm:$0xff] %vm275, %v273
  %279 = vst.msk [vmem:[%s2 + $0x18] sm:$0xff] %vm275, %v274
  // Predicated region
  $region10: #{policy_forward.1} parent=0 // pred_check
    _
  $region11: #{policy_forward.1} parent=0 // pred_check_branch
    %281 = sbr.rel (0) target = $region13
  $region12: #{policy_forward.1} parent=0 // pred_region
    _
  $region13: #{policy_forward.1} parent=0 // pred_fallthru
    _
  // Predicated region
  $region14: #{policy_forward.1} parent=0 // pred_check
    _
  $region15: #{policy_forward.1} parent=0 // pred_check_branch
    %283 = sbr.rel (0) target = $region17
  $region16: #{policy_forward.1} parent=0 // pred_region
    _
  $region17: #{policy_forward.1} parent=0 // pred_fallthru
    _

</llo_original>
